<compile_context>
chip_gen: v7x
topology: tpu7x:2x2x1
jax: 0.10.0
libtpu: 0.0.40
codegen_flags: <defaults>
</compile_context>

<pallas_src>
import jax
import jax.numpy as jnp
from jax.experimental import pallas as pl
from jax.experimental.pallas import tpu as pltpu


def _splade_pool_kernel(len_ref, emb_ref, out_ref):
    # len_ref : (Bt, 1, 1) int32   number of valid tokens per batch row
    # emb_ref : (Bt, tS, tD)       token embeddings, original dtype (bf16/f32/...)
    # out_ref : (Bt, tD) float32   running max accumulator; log1p applied on last S step
    s = pl.program_id(2)
    num_s = pl.num_programs(2)
    bt, ts, _ = emb_ref.shape

    # relu is folded into the accumulator: init to 0 and never go below it.
    @pl.when(s == 0)
    def _init():
        out_ref[...] = jnp.zeros_like(out_ref)

    x = emb_ref[...]  # stay in the input dtype (no f32 widen of the big block)

    # Rebuild the padding mask from per-row lengths: global token index along S (sublanes).
    sidx = jax.lax.broadcasted_iota(jnp.int32, (bt, ts, 1), 1) + s * ts
    valid = sidx < len_ref[...]                                   # (Bt, tS, 1) bool
    # jnp.where (not multiply) so stale garbage in OOB rows of a partial S block can
    # never leak into valid outputs, even if it decodes to NaN/Inf.
    masked = jnp.where(valid, x, jnp.zeros((), dtype=x.dtype))
    partial = jnp.max(masked, axis=1)                             # (Bt, tD), input dtype

    out_ref[...] = jnp.maximum(out_ref[...], partial.astype(jnp.float32))

    @pl.when(s == num_s - 1)
    def _finalize():
        # max-then-log1p: exact for a 0/1 mask since log1p is monotone and log1p(0)=0.
        out_ref[...] = jnp.log1p(out_ref[...])


def _choose_tiles(B, S, D, itemsize, target_block_bytes):
    """Pick (Bt, tS, tD) for the (Bt, tS, tD) embedding block.

    tD: full D when D <= 1024 (allowed even if not a multiple of 128), otherwise a
        lane-dense 1024 with a masked partial final block (so D = vocab ~30522 never
        blows up VMEM).  tS: as large as the budget allows (multiple of 8, or full S).
    """
    Bt = min(B, 8)                        # fills the 8-sublane output vreg rows
    tD = D if D <= 1024 else 1024         # 1024 is a multiple of 128
    max_ts = max(8, target_block_bytes // (Bt * tD * itemsize))
    tS = S if S <= max_ts else (max_ts // 8) * 8
    return Bt, tS, tD


def splade_pooling(token_embeddings: jax.Array,
                   attention_mask: jax.Array,
                   *,
                   target_block_bytes: int = 8 * 1024 * 1024) -> jax.Array:
    """SPLADE max pooling.

    token_embeddings: [B, S, D] (any float dtype); attention_mask: [B, S] binary
    padding mask (1 = valid token, 0 = padding; standard left-contiguous mask).
    Returns sentence_embedding: [B, D] float32.
    """
    B, S, D = token_embeddings.shape
    assert attention_mask.shape == (B, S), attention_mask.shape

    # Tiny per-row valid-token counts replace the dense mask on the HBM path.
    lengths = jnp.sum(attention_mask.astype(jnp.int32), axis=-1).reshape(B, 1, 1)

    Bt, tS, tD = _choose_tiles(B, S, D, token_embeddings.dtype.itemsize,
                               target_block_bytes)
    grid = (pl.cdiv(B, Bt), pl.cdiv(D, tD), pl.cdiv(S, tS))

    return pl.pallas_call(
        _splade_pool_kernel,
        out_shape=jax.ShapeDtypeStruct((B, D), jnp.float32),
        grid_spec=pltpu.PrefetchScalarGridSpec(
            num_scalar_prefetch=0,
            grid=grid,
            in_specs=[
                pl.BlockSpec((Bt, 1, 1), lambda b, d, s: (b, 0, 0)),      # lengths
                pl.BlockSpec((Bt, tS, tD), lambda b, d, s: (b, s, d)),    # embeddings
            ],
            out_specs=pl.BlockSpec((Bt, tD), lambda b, d, s: (b, d)),
        ),
        compiler_params=pltpu.CompilerParams(
            dimension_semantics=("parallel", "parallel", "arbitrary"),
            vmem_limit_bytes=40 * 1024 * 1024,
        ),
    )(lengths, token_embeddings)


def splade_pooling_ref(token_embeddings, attention_mask):
    x = jnp.log1p(jnp.maximum(token_embeddings.astype(jnp.float32), 0.0))
    x = x * attention_mask.astype(jnp.float32)[..., None]
    return jnp.max(x, axis=1)


if __name__ == "__main__":
    key = jax.random.PRNGKey(0)
    k1, k2, k3 = jax.random.split(key, 3)

    # Case 1: small f32, single block everywhere.
    B, S, D = 2, 8, 256  # word_embedding_dimension = 256
    emb1 = jax.random.normal(k1, (B, S, D), dtype=jnp.float32)
    lens1 = jnp.array([6, 4], dtype=jnp.int32)
    mask1 = (jnp.arange(S)[None, :] < lens1[:, None]).astype(jnp.int32)
    out1 = jax.block_until_ready(splade_pooling(emb1, mask1))
    ref1 = splade_pooling_ref(emb1, mask1)
    assert out1.shape == (B, D), out1.shape
    assert jnp.allclose(out1, ref1, atol=1e-5, rtol=1e-5), "f32 mismatch vs reference"

    # Case 2: bf16, B > 8 (partial batch block), no batch padding in the wrapper.
    B2, S2, D2 = 10, 16, 512
    emb2 = jax.random.normal(k2, (B2, S2, D2), dtype=jnp.bfloat16)
    lens2 = (jnp.arange(B2, dtype=jnp.int32) % S2) + 1
    mask2 = (jnp.arange(S2)[None, :] < lens2[:, None]).astype(jnp.int32)
    out2 = jax.block_until_ready(splade_pooling(emb2, mask2))
    ref2 = splade_pooling_ref(emb2, mask2)
    assert out2.shape == (B2, D2), out2.shape
    assert jnp.allclose(out2, ref2, atol=2e-2, rtol=2e-2), "bf16 mismatch vs reference"

    # Case 3: D not a multiple of 128 (partial D block) + forced S tiling to exercise
    # the running-max accumulator across the S grid axis, plus an all-masked row.
    B3, S3, D3 = 3, 24, 1200
    emb3 = jax.random.normal(k3, (B3, S3, D3), dtype=jnp.float32)
    lens3 = jnp.array([24, 7, 0], dtype=jnp.int32)
    mask3 = (jnp.arange(S3)[None, :] < lens3[:, None]).astype(jnp.int32)
    out3 = jax.block_until_ready(
        splade_pooling(emb3, mask3, target_block_bytes=128 * 1024))
    ref3 = splade_pooling_ref(emb3, mask3)
    assert out3.shape == (B3, D3), out3.shape
    assert jnp.allclose(out3, ref3, atol=1e-5, rtol=1e-5), "tiled-S mismatch vs reference"

    print("KERNEL_OK")
</pallas_src>

<mosaic_0001>
module attributes {stable_mosaic.version = 11 : i64} {
  func.func @_splade_pool_kernel(%arg0: i32, %arg1: i32, %arg2: i32, %arg3: memref<2x1x1xi32, #tpu.memory_space<vmem>>, %arg4: memref<2x8x256xf32, #tpu.memory_space<vmem>>, %arg5: memref<2x256xf32, #tpu.memory_space<vmem>>) attributes {dimension_semantics = [#tpu.dimension_semantics<parallel>, #tpu.dimension_semantics<parallel>, #tpu.dimension_semantics<arbitrary>], iteration_bounds = array<i64: 1, 1, 1>, scalar_prefetch = 0 : i64, scratch_operands = 0 : i64, tpu.core_type = #tpu.core_type<tc>, window_params = [{transform_indices = @transform_0, window_bounds = array<i64: 2, 1, 1>}, {transform_indices = @transform_1, window_bounds = array<i64: 2, 8, 256>}, {transform_indices = @transform_2, window_bounds = array<i64: 2, 256>}]} {
    %c0_i32 = arith.constant 0 : i32
    %0 = arith.cmpi eq, %arg2, %c0_i32 : i32
    %1 = arith.extui %0 : i1 to i32
    %c0_i32_0 = arith.constant 0 : i32
    %2 = arith.cmpi ne, %1, %c0_i32_0 : i32
    scf.if %2 {
      %cst_13 = arith.constant 0.000000e+00 : f32
      %22 = vector.broadcast %cst_13 : f32 to vector<2x256xf32>
      %c0_14 = arith.constant 0 : index
      %c0_15 = arith.constant 0 : index
      %23 = vector.load %arg5[%c0_14, %c0_15] : memref<2x256xf32, #tpu.memory_space<vmem>>, vector<2x256xf32>
      tpu.vector_store %arg5[%c0_14, %c0_15], %22 {strides = array<i32>} : memref<2x256xf32, #tpu.memory_space<vmem>>, vector<2x256xf32>,
    } else {
    }
    %c0 = arith.constant 0 : index
    %c0_1 = arith.constant 0 : index
    %c0_2 = arith.constant 0 : index
    %3 = vector.load %arg4[%c0, %c0_1, %c0_2] : memref<2x8x256xf32, #tpu.memory_space<vmem>>, vector<2x8x256xf32>
    %4 = tpu.iota {dimensions = array<i32: 1>} : vector<2x8x1xi32>
    %c8_i32 = arith.constant 8 : i32
    %5 = arith.muli %arg2, %c8_i32 : i32
    %6 = vector.broadcast %5 : i32 to vector<2x8x1xi32>
    %7 = arith.addi %4, %6 : vector<2x8x1xi32>
    %c0_3 = arith.constant 0 : index
    %c0_4 = arith.constant 0 : index
    %c0_5 = arith.constant 0 : index
    %8 = vector.load %arg3[%c0_3, %c0_4, %c0_5] : memref<2x1x1xi32, #tpu.memory_space<vmem>>, vector<2x1x1xi32>
    %9 = vector.broadcast %8 : vector<2x1x1xi32> to vector<2x8x1xi32>
    %10 = arith.cmpi slt, %7, %9 : vector<2x8x1xi32>
    %cst = arith.constant 0.000000e+00 : f32
    %11 = vector.shape_cast %10 : vector<2x8x1xi1> to vector<2x8x1xi1>
    %12 = vector.broadcast %11 : vector<2x8x1xi1> to vector<2x8x256xi1>
    %13 = vector.broadcast %cst : f32 to vector<2x8x256xf32>
    %14 = arith.select %12, %3, %13 : vector<2x8x256xi1>, vector<2x8x256xf32>
    %cst_6 = arith.constant dense<0xFF800000> : vector<2x256xf32>
    %15 = vector.multi_reduction <maximumf>, %14, %cst_6 [1] : vector<2x8x256xf32> to vector<2x256xf32>
    %c0_7 = arith.constant 0 : index
    %c0_8 = arith.constant 0 : index
    %16 = vector.load %arg5[%c0_7, %c0_8] : memref<2x256xf32, #tpu.memory_space<vmem>>, vector<2x256xf32>
    %17 = arith.maximumf %16, %15 : vector<2x256xf32>
    %c0_9 = arith.constant 0 : index
    %c0_10 = arith.constant 0 : index
    %18 = vector.load %arg5[%c0_9, %c0_10] : memref<2x256xf32, #tpu.memory_space<vmem>>, vector<2x256xf32>
    tpu.vector_store %arg5[%c0_9, %c0_10], %17 {strides = array<i32>} : memref<2x256xf32, #tpu.memory_space<vmem>>, vector<2x256xf32>,
    %c0_i32_11 = arith.constant 0 : i32
    %19 = arith.cmpi eq, %arg2, %c0_i32_11 : i32
    %20 = arith.extui %19 : i1 to i32
    %c0_i32_12 = arith.constant 0 : i32
    %21 = arith.cmpi ne, %20, %c0_i32_12 : i32
    scf.if %21 {
      %c0_13 = arith.constant 0 : index
      %c0_14 = arith.constant 0 : index
      %22 = vector.load %arg5[%c0_13, %c0_14] : memref<2x256xf32, #tpu.memory_space<vmem>>, vector<2x256xf32>
      %23 = math.log1p %22 : vector<2x256xf32>
      %c0_15 = arith.constant 0 : index
      %c0_16 = arith.constant 0 : index
      %24 = vector.load %arg5[%c0_15, %c0_16] : memref<2x256xf32, #tpu.memory_space<vmem>>, vector<2x256xf32>
      tpu.vector_store %arg5[%c0_15, %c0_16], %23 {strides = array<i32>} : memref<2x256xf32, #tpu.memory_space<vmem>>, vector<2x256xf32>,
    } else {
    }
    return
  }
  func.func @transform_0(%arg0: i32, %arg1: i32, %arg2: i32) -> (i32, i32, i32) {
    %c0_i32 = arith.constant 0 : i32
    %c0_i32_0 = arith.constant 0 : i32
    %c0_i32_1 = arith.constant 0 : i32
    return %arg0, %c0_i32, %c0_i32_0 : i32, i32, i32
  }
  func.func @transform_1(%arg0: i32, %arg1: i32, %arg2: i32) -> (i32, i32, i32) {
    %c0_i32 = arith.constant 0 : i32
    return %arg0, %arg2, %arg1 : i32, i32, i32
  }
  func.func @transform_2(%arg0: i32, %arg1: i32, %arg2: i32) -> (i32, i32) {
    %c0_i32 = arith.constant 0 : i32
    return %arg0, %arg1 : i32, i32
  }
}

</mosaic_0001>

<llo_original>
// kernel: tpu_custom_call.1
$region0: #{tpu_custom_call.1}
  #allocation0 [shape = 'u32[]', space=smem, size = 0x4, offset = 0x4, fixed_abs, tag = 'smem constant byte address 0x4 - core index']
  #allocation1 [shape = 'u32[144,128]{1,0:T(1,128)}', space=vmem, size = 0x12000, scoped, tag = 'internal scratch']
  %s0 = inlined_call_operand.vmem [shape: s32[2,1,1], index: 0, kind: input, shape index: {}]
  %s1 = inlined_call_operand.hbm [shape: f32[2,8,256], index: 1, kind: input, shape index: {}]
  %s2 = inlined_call_operand.hbm [shape: f32[2,256], index: 2, kind: output, shape index: {}]
  %s3 = sld [smem:[#allocation0]]
  $region30: #{tpu_custom_call.1} parent=0
    _
  %s5 = ssub.s32 1, %s3
  %s6 = scalar_select 0, %s5, %s3
  $region1: #{tpu_custom_call.1} parent=0
    #allocation2 [shape = 'u8[16384]{0}', space=vmem, size = 0x4000, scoped, tag = 'input window, operand 1, single buffered']
    #allocation3 [shape = 's32[1]{0}', space=sflag, size = 0x4, scoped, tag = 'scoped memory for tpu_custom_call.1']
    #allocation4 [shape = 's32[1]{0}', space=sflag, size = 0x4, scoped, tag = 'scoped memory for tpu_custom_call.1']
    #allocation5 [shape = 'u8[2048]{0}', space=vmem, size = 0x800, scoped, tag = 'output window, operand 0, single buffered']
    %7 = vsyncpa [#allocation3], 0
    %8 = vsyncpa [#allocation4], 0
    // Predicated region
    $region2: #{tpu_custom_call.1} parent=1 // pred_check
      _
    $region3: #{tpu_custom_call.1} parent=1 // pred_check_branch
      %10 = sbr.rel (0) target = $region5
    $region4: #{tpu_custom_call.1} parent=1 // pred_region
      _
    $region5: #{tpu_custom_call.1} parent=1 // pred_fallthru
      _
    // Predicated region
    $region6: #{tpu_custom_call.1} parent=1 // pred_check
      _
    $region7: #{tpu_custom_call.1} parent=1 // pred_check_branch
      %12 = sbr.rel (0) target = $region9
    $region8: #{tpu_custom_call.1} parent=1 // pred_region
      %s14 = ssub.s32 512, 512
      %15 = vsyncadd [#allocation3], %s14
      %s16 = sshll.u32 [#allocation2], 4
      %s17 = int_to_ptr.vmem [resolvable:$true] %s16
      %22 = dma.hbm_to_vmem [thread:$0]  %s1, 512, %s17, [#allocation3], 256, 256, 16
    $region9: #{tpu_custom_call.1} parent=1 // pred_fallthru
      _
    // Predicated region
    $region10: #{tpu_custom_call.1} parent=1 // pred_check
      _
    $region11: #{tpu_custom_call.1} parent=1 // pred_check_branch
      %24 = sbr.rel (0) target = $region13
    $region12: #{tpu_custom_call.1} parent=1 // pred_region
      %25 = dma.done [#allocation3], 512
    $region13: #{tpu_custom_call.1} parent=1 // pred_fallthru
      _
    %p26 = scmp.eq.s32.totalorder 0, 0
    // Predicated region
    $region14: #{tpu_custom_call.1} parent=1 // pred_check
      %p27 = pneg %p26
    $region15: #{tpu_custom_call.1} parent=1 // pred_check_branch
      %29 = sbr.rel (%p27) target = $region17
    $region16: #{tpu_custom_call.1} parent=1 // pred_region
      %30 = vst [vmem:[#allocation5] sm:$0xf] 0.0
    $region17: #{tpu_custom_call.1} parent=1 // pred_fallthru
      _
    %v31 = vld [vmem:[#allocation2] sm:$0xff]
    %v32 = vld [vmem:[#allocation2 + $0x8] sm:$0xff]
    %v33 = vld [vmem:[#allocation2 + $0x10] sm:$0xff]
    %v34 = vld [vmem:[#allocation2 + $0x18] sm:$0xff]
    %v35 = vlaneseq
    %v36 = vshrl.u32 %v35, 7
    %s37 = smul.u32 0, 8
    %v38 = vstv %s37
    %v39 = vadd.s32 %v36, %v38
    %v40 = vld [vmem:[%s0] sm:$0x1]
    %v41 = vld [vmem:[%s0 + $0x1] sm:$0x1]
    %v42 = vlaneseq
    %v43 = vshrl.u32 %v42, 7
    %v44 = vsub.s32 0, %v43
    %v45 = vrot.slane %v40, %v44
    %v46 = vlaneseq
    %v47 = vshrl.u32 %v46, 7
    %v48 = vsub.s32 0, %v47
    %v49 = vrot.slane %v41, %v48
    %vm50 = vcmp.lt.s32.totalorder %v39, %v45
    %vm51 = vcmp.lt.s32.totalorder %v39, %v49
    %v52 = vsel %vm50, 1, 0
    %v53 = vsel %vm51, 1, 0
    %54 = vset.pattern.permute.xlu0 0
    %55 = vperm.xlu0 %54, %v52
    %v56 = vpop.permute.xlu0 %55
    %57 = vset.pattern.permute.xlu0 0
    %58 = vperm.xlu0 %57, %v53
    %v59 = vpop.permute.xlu0 %58
    %vm60 = vcmp.eq.s32.totalorder %v56, 1
    %vm61 = vcmp.eq.s32.totalorder %v59, 1
    %v62 = vsel %vm60, %v31, 0.0
    %v63 = vsel %vm60, %v32, 0.0
    %v64 = vsel %vm61, %v33, 0.0
    %v65 = vsel %vm61, %v34, 0.0
    %v66 = vrot.slane %v62, 4
    %v67 = vmax.f32 %v62, %v66
    %v68 = vrot.slane %v67, 2
    %v69 = vmax.f32 %v67, %v68
    %v70 = vrot.slane %v69, 1
    %v71 = vmax.f32 %v69, %v70
    %v72 = vrot.slane %v63, 4
    %v73 = vmax.f32 %v63, %v72
    %v74 = vrot.slane %v73, 2
    %v75 = vmax.f32 %v73, %v74
    %v76 = vrot.slane %v75, 1
    %v77 = vmax.f32 %v75, %v76
    %v78 = vrot.slane %v64, 4
    %v79 = vmax.f32 %v64, %v78
    %v80 = vrot.slane %v79, 2
    %v81 = vmax.f32 %v79, %v80
    %v82 = vrot.slane %v81, 1
    %v83 = vmax.f32 %v81, %v82
    %v84 = vrot.slane %v65, 4
    %v85 = vmax.f32 %v65, %v84
    %v86 = vrot.slane %v85, 2
    %v87 = vmax.f32 %v85, %v86
    %v88 = vrot.slane %v87, 1
    %v89 = vmax.f32 %v87, %v88
    %v90 = vld [vmem:[#allocation5] sm:$0xf]
    %v95 = vcombine.low %v71, %v77
    %v97 = vunpack.c.l.s4 1983009808
    %v98 = vunpack.c.0.s8 %v97
    %v99 = vlaneseq
    %v100 = vshrl.u32 %v99, 7
    %v101 = vsub.s32 %v98, %v100
    %v102 = vrot.slane %v95, %v101
    %v103 = vcombine.low %v83, %v89
    %v105 = vunpack.c.l.s4 1983009808
    %v106 = vunpack.c.0.s8 %v105
    %v107 = vlaneseq
    %v108 = vshrl.u32 %v107, 7
    %v109 = vsub.s32 %v106, %v108
    %v110 = vrot.slane %v103, %v109
    %vm111 = vcmask 1044484
    %v112 = vsel %vm111, %v102, %v102
    %vm113 = vcmask 1046534
    %v114 = vsel %vm113, %v102, %v112
    %v115 = vrot.slane %v110, 7
    %vm116 = vcmask 1041409
    %v117 = vsel %vm116, %v115, %v114
    %vm118 = vcmask 1043459
    %v119 = vsel %vm118, %v115, %v117
    %vm120 = vcmask 1045509
    %v121 = vsel %vm120, %v115, %v119
    %vm122 = vcmask 1047559
    %v123 = vsel %vm122, %v115, %v121
    %v125 = vmax.f32 %v90, %v123
    %126 = vst [vmem:[#allocation5] sm:$0xf] %v125
    // Predicated region
    $region18: #{tpu_custom_call.1} parent=1 // pred_check
      %p127 = pneg %p26
    $region19: #{tpu_custom_call.1} parent=1 // pred_check_branch
      %129 = sbr.rel (%p127) target = $region21
    $region20: #{tpu_custom_call.1} parent=1 // pred_region
      %v130 = vld [vmem:[#allocation5] sm:$0xf]
      %v131 = vadd.f32 %v130, 1.0
      %v132 = vlog2.pop %v131
      %v133 = vmul.f32 %v132, 0.6931472
      %v134 = vmul.f32 -0.5, %v130
      %v135 = vadd.f32 %v134, 1.0
      %v136 = vmul.f32 %v135, %v130
      %v137 = vand.u32 2147483647, %v130
      %vm138 = vcmp.lt.f32.partialorder %v137, 0.0004427343
      %v139 = vsel %vm138, %v136, %v133
      %140 = vst [vmem:[#allocation5] sm:$0xf] %v139
    $region21: #{tpu_custom_call.1} parent=1 // pred_fallthru
      _
    // Predicated region
    $region22: #{tpu_custom_call.1} parent=1 // pred_check
      _
    $region23: #{tpu_custom_call.1} parent=1 // pred_check_branch
      %142 = sbr.rel (0) target = $region25
    $region24: #{tpu_custom_call.1} parent=1 // pred_region
      %s144 = ssub.s32 64, 64
      %145 = vsyncadd [#allocation4], %s144
      %s147 = sshll.u32 [#allocation5], 4
      %s148 = int_to_ptr.vmem [resolvable:$true] %s147
      %150 = dma.vmem_to_hbm [thread:$0]  %s148, 64, %s2, [#allocation4]
    $region25: #{tpu_custom_call.1} parent=1 // pred_fallthru
      _
    // Predicated region
    $region26: #{tpu_custom_call.1} parent=1 // pred_check
      _
    $region27: #{tpu_custom_call.1} parent=1 // pred_check_branch
      %152 = sbr.rel (0) target = $region29
    $region28: #{tpu_custom_call.1} parent=1 // pred_region
      %153 = dma.done [#allocation4], 64
    $region29: #{tpu_custom_call.1} parent=1 // pred_fallthru
      _
    %154 = vsyncpa [#allocation3], 1
    %155 = vsyncpa [#allocation4], 1

</llo_original>
